<compile_context>
chip_gen: v7x
topology: tpu7x:2x2x1
jax: 0.10.0
libtpu: 0.0.40
codegen_flags: <defaults>
</compile_context>

<pallas_src>
import functools

import jax
import jax.numpy as jnp
from jax import lax
from jax.experimental import pallas as pl
from jax.experimental.pallas import tpu as pltpu


def _round_up(x, m):
    return ((x + m - 1) // m) * m


def _device_defaults():
    """Generation-aware default tiles and per-core VMEM capacity (bytes)."""
    kind = ""
    try:
        kind = jax.devices()[0].device_kind.lower()
    except Exception:
        pass
    vmem_cap = None
    try:
        vmem_cap = int(pltpu.get_tpu_info().vmem_capacity_bytes)
    except Exception:
        vmem_cap = None

    if "v7" in kind:
        # v7x: ~310 FLOP/byte machine balance, 64 MiB VMEM per TensorCore.
        block_t, block_v, default_cap = 512, 512, 64 << 20
    elif "v5 lite" in kind or "v5e" in kind or "v5lite" in kind:
        # v5e: ~240 FLOP/byte balance, 128 MiB VMEM.
        block_t, block_v, default_cap = 512, 1024, 128 << 20
    elif "v6" in kind or "v5" in kind or "v4" in kind:
        # v6e: ~680 FLOP/byte balance -> need tall token tiles; 128 MiB VMEM.
        block_t, block_v, default_cap = 1024, 512, 128 << 20
    else:
        block_t, block_v, default_cap = 512, 512, 64 << 20

    if vmem_cap is None or vmem_cap <= 0:
        vmem_cap = default_cap
    return block_t, block_v, vmem_cap


def _vmem_footprint(block_t, block_v, H, x_isz, w_isz, weight_buffers=2):
    """Rough VMEM working-set estimate for one grid step (bytes)."""
    wb = max(2, int(weight_buffers))
    return (2 * block_t * H * x_isz          # double-buffered x tiles
            + wb * block_v * H * w_isz       # weight tiles
            + 2 * 8 * block_v * 4            # bias tiles
            + 2 * block_t * 128 * 4          # target tiles (lane-padded)
            + 4 * block_t * block_v * 4      # logits + elementwise temporaries
            + 8 * block_t * 128 * 4)         # scratch + output bufs (lane-padded)


def _fit_to_vmem(block_t, block_v, H, x_isz, w_isz, budget, weight_buffers=2):
    """Halve tiles (keeping 8/128 alignment) until the working set fits."""
    while _vmem_footprint(block_t, block_v, H, x_isz, w_isz,
                          weight_buffers) > budget:
        if block_v > 512 and block_v >= block_t:
            block_v = max(128, _round_up(block_v // 2, 128))
        elif block_t > 64:
            block_t = max(8, _round_up(block_t // 2, 8))
        elif block_v > 128:
            block_v = max(128, _round_up(block_v // 2, 128))
        else:
            break
    return block_t, block_v


def _flce_kernel(x_ref, w_ref, b_ref, tgt_ref, loss_ref, zloss_ref,
                 m_sc, d_sc, xt_sc, sx_sc,
                 *, vocab_size, tv, ignore_index, lse_square_scale,
                 label_smoothing, softcap, mask_pad_in_kernel):
    """Grid = (token_blocks, vocab_blocks); vocab is the reduction axis."""
    vi = pl.program_id(1)

    @pl.when(vi == 0)
    def _():
        m_sc[...] = jnp.full_like(m_sc, -jnp.inf)
        d_sc[...] = jnp.zeros_like(d_sc)
        xt_sc[...] = jnp.zeros_like(xt_sc)
        if label_smoothing > 0.0:
            sx_sc[...] = jnp.zeros_like(sx_sc)

    # Native-dtype (bf16) operands straight into the MXU, f32 accumulation.
    # Contraction over H on both tiles -> native transposed-RHS matmul,
    # no weight-tile transpose materialized.
    logits = lax.dot_general(
        x_ref[...], w_ref[...],
        dimension_numbers=(((1,), (1,)), ((), ())),
        preferred_element_type=jnp.float32)              # (tm, tv) f32
    logits = logits + b_ref[...].astype(jnp.float32)     # (1, tv) broadcast

    if softcap is not None:
        inv_cap = 1.0 / softcap                          # Python constant
        logits = softcap * jnp.tanh(logits * inv_cap)

    # (1, tv) column index; comparisons below broadcast against (tm, 1).
    # Avoids a (tm, tv) int32 temp and a full-tile VALU add per vocab step.
    col = lax.broadcasted_iota(jnp.int32, (1, tv), 1) + vi * tv
    tgt = tgt_ref[...]                                   # (tm, 1) int32
    is_tgt = col == tgt                                  # (tm, tv)

    # Accumulate logit at the target index (only the owning chunk matches;
    # padded columns have col >= vocab_size > any valid target).
    xt_sc[...] += jnp.sum(jnp.where(is_tgt, logits, 0.0), axis=1, keepdims=True)

    if mask_pad_in_kernel:
        in_vocab = col < vocab_size                      # (1, tv)
        if label_smoothing > 0.0:
            sx_sc[...] += jnp.sum(jnp.where(in_vocab, logits, 0.0),
                                  axis=1, keepdims=True)
        # NaN-safety: every vocab chunk contains at least one real column
        # (pad width < tv, asserted in the wrapper), so the running max never
        # stays at -inf.
        logits = jnp.where(in_vocab, logits, -jnp.inf)
    elif label_smoothing > 0.0:
        sx_sc[...] += jnp.sum(logits, axis=1, keepdims=True)

    # Online logsumexp accumulation.
    m_new = jnp.maximum(m_sc[...], jnp.max(logits, axis=1, keepdims=True))
    d_sc[...] = d_sc[...] * jnp.exp(m_sc[...] - m_new) + jnp.sum(
        jnp.exp(logits - m_new), axis=1, keepdims=True)
    m_sc[...] = m_new

    @pl.when(vi == pl.num_programs(1) - 1)
    def _():
        lse = m_sc[...] + jnp.log(d_sc[...])             # (tm, 1)
        loss = lse - xt_sc[...]
        if label_smoothing > 0.0:
            eps = label_smoothing / vocab_size
            smooth_loss = -eps * sx_sc[...] + label_smoothing * lse
            loss = loss * (1.0 - label_smoothing) + smooth_loss
        z_loss = lse_square_scale * lse * lse
        loss = loss + z_loss
        valid = tgt != ignore_index
        loss_ref[...] = jnp.where(valid, loss, 0.0)
        zloss_ref[...] = jnp.where(valid, z_loss, 0.0)


def fused_linear_cross_entropy(lin_weight, _input, target, bias=None, *,
                               ce_weight=None, ignore_index=-100,
                               lse_square_scale=0.0, label_smoothing=0.0,
                               reduction='mean', softcap=None,
                               return_z_loss=False,
                               block_t=None, block_v=None,
                               weight_buffers=2,
                               matmul_dtype=jnp.bfloat16):
    # TODO(synk): per-class ce_weight is not implemented in the kernel path.
    assert ce_weight is None, "ce_weight not supported in this Pallas port"
    assert reduction in ('mean', 'sum')

    BT, H = _input.shape
    V, H2 = lin_weight.shape
    assert H == H2

    auto_bt, auto_bv, vmem_cap = _device_defaults()
    if block_t is None:
        block_t = auto_bt
    if block_v is None:
        block_v = auto_bv

    # NOTE: keep weights/activations persistently in `matmul_dtype` (bf16)
    # outside the training-step if possible; casting here re-streams a full
    # V*H copy through HBM on every call.
    x = (_input if (matmul_dtype is None or _input.dtype == matmul_dtype)
         else _input.astype(matmul_dtype))
    w = (lin_weight if (matmul_dtype is None or lin_weight.dtype == matmul_dtype)
         else lin_weight.astype(matmul_dtype))

    if bias is None:
        bias_f32 = jnp.zeros((V,), dtype=jnp.float32)
    else:
        bias_f32 = bias.astype(jnp.float32)

    x_isz = jnp.dtype(x.dtype).itemsize
    w_isz = jnp.dtype(w.dtype).itemsize

    # Clip tiles to the (padded) problem dims, then shrink until the
    # double-buffered working set fits ~80% of the per-core VMEM capacity.
    block_t = max(8, min(block_t, _round_up(BT, 8)))
    block_v = max(128, min(block_v, _round_up(V, 128)))
    budget = int(0.80 * vmem_cap)
    block_t, block_v = _fit_to_vmem(block_t, block_v, H, x_isz, w_isz,
                                    budget, weight_buffers)

    BT_p = _round_up(BT, block_t)
    V_p = _round_up(V, block_v)
    pad_v = V_p - V
    # Pad always lives inside the last chunk => every chunk keeps >=1 real
    # column, so the -inf running max in the kernel never stays at -inf.
    assert pad_v < block_v

    # If the padded vocab tail needs neither the label-smoothing logit sum nor
    # the (softcap-unsafe) raw pass-through, neutralize it with a very
    # negative bias instead of per-step compare/select masking in the kernel.
    mask_pad_in_kernel = pad_v > 0 and (softcap is not None
                                        or label_smoothing > 0.0)
    pad_bias_value = 0.0 if (pad_v == 0 or mask_pad_in_kernel) else -1e30

    target_i32 = target.astype(jnp.int32)
    if BT_p != BT:
        x = jnp.pad(x, ((0, BT_p - BT), (0, 0)))
        target_p = jnp.concatenate(
            [target_i32,
             jnp.full((BT_p - BT,), ignore_index, dtype=jnp.int32)])
    else:
        target_p = target_i32
    if pad_v:
        w = jnp.pad(w, ((0, pad_v), (0, 0)))
        bias_f32 = jnp.pad(bias_f32, ((0, pad_v),),
                           constant_values=pad_bias_value)

    bias2d = bias_f32.reshape(1, V_p)
    tgt2d = target_p.reshape(BT_p, 1)

    kernel = functools.partial(
        _flce_kernel, vocab_size=V, tv=block_v, ignore_index=ignore_index,
        lse_square_scale=lse_square_scale, label_smoothing=label_smoothing,
        softcap=softcap, mask_pad_in_kernel=mask_pad_in_kernel)

    footprint = _vmem_footprint(block_t, block_v, H, x_isz, w_isz,
                                weight_buffers)
    vmem_limit = int(min(max(int(1.25 * footprint), 32 << 20),
                         int(0.90 * vmem_cap)))

    cost = pl.CostEstimate(
        flops=2 * BT_p * V_p * H,
        transcendentals=BT_p * V_p * (2 if softcap is not None else 1),
        bytes_accessed=((BT_p // block_t) * V_p * H * w_isz
                        + BT_p * H * x_isz + V_p * 4 + 3 * BT_p * 4))

    # Optional extra weight buffering (only if explicitly requested) to hide
    # the token-block-boundary DMA bubble; default double-buffering otherwise.
    if weight_buffers and weight_buffers > 2:
        w_spec = pl.BlockSpec((block_v, H), lambda ti, vi: (vi, 0),
                              pipeline_mode=pl.Buffered(weight_buffers))
    else:
        w_spec = pl.BlockSpec((block_v, H), lambda ti, vi: (vi, 0))

    loss_tok, zloss_tok = pl.pallas_call(
        kernel,
        out_shape=(jax.ShapeDtypeStruct((BT_p, 1), jnp.float32),
                   jax.ShapeDtypeStruct((BT_p, 1), jnp.float32)),
        grid_spec=pltpu.PrefetchScalarGridSpec(
            num_scalar_prefetch=0,
            grid=(BT_p // block_t, V_p // block_v),
            in_specs=[
                pl.BlockSpec((block_t, H), lambda ti, vi: (ti, 0)),   # _input
                w_spec,                                               # weight
                pl.BlockSpec((1, block_v), lambda ti, vi: (0, vi)),   # bias
                pl.BlockSpec((block_t, 1), lambda ti, vi: (ti, 0)),   # target
            ],
            out_specs=[
                pl.BlockSpec((block_t, 1), lambda ti, vi: (ti, 0)),
                pl.BlockSpec((block_t, 1), lambda ti, vi: (ti, 0)),
            ],
            scratch_shapes=[pltpu.VMEM((block_t, 1), jnp.float32)] * 4,
        ),
        compiler_params=pltpu.CompilerParams(
            dimension_semantics=("parallel", "arbitrary"),
            vmem_limit_bytes=vmem_limit),
        cost_estimate=cost,
    )(x, w, bias2d, tgt2d)

    loss_sum = jnp.sum(loss_tok)
    zloss_sum = jnp.sum(zloss_tok)
    if reduction == 'mean':
        n_non_ignore = jnp.sum((target_i32 != ignore_index).astype(jnp.float32))
        loss = loss_sum / n_non_ignore
        z_loss = zloss_sum / n_non_ignore
    else:
        loss = loss_sum
        z_loss = zloss_sum

    if return_z_loss:
        return loss, z_loss
    return loss


class LigerFusedLinearCrossEntropyLoss:
    """JAX/Pallas mirror of the PyTorch module (forward only)."""

    def __init__(self, ce_weight=None, ignore_index=-100, lse_square_scale=0.0,
                 label_smoothing=0.0, reduction='mean', softcap=None,
                 return_z_loss=False):
        assert 0.0 <= label_smoothing <= 1.0
        assert reduction in {'mean', 'sum'}
        assert softcap is None or softcap > 0
        self.ce_weight = ce_weight
        self.ignore_index = ignore_index
        self.lse_square_scale = lse_square_scale
        self.label_smoothing = label_smoothing
        self.reduction = reduction
        self.softcap = softcap
        self.return_z_loss = return_z_loss

    def __call__(self, lin_weight, _input, target, bias=None):
        return fused_linear_cross_entropy(
            lin_weight, _input, target, bias,
            ce_weight=self.ce_weight, ignore_index=self.ignore_index,
            lse_square_scale=self.lse_square_scale,
            label_smoothing=self.label_smoothing, reduction=self.reduction,
            softcap=self.softcap, return_z_loss=self.return_z_loss)


def _reference(lin_weight, x, target, bias, *, ignore_index, lse_square_scale,
               label_smoothing, reduction, softcap):
    logits = x.astype(jnp.float32) @ lin_weight.astype(jnp.float32).T
    logits = logits + bias.astype(jnp.float32)[None, :]
    if softcap is not None:
        logits = softcap * jnp.tanh(logits / softcap)
    V = logits.shape[1]
    lse = jax.scipy.special.logsumexp(logits, axis=1)
    valid = target != ignore_index
    tgt_safe = jnp.where(valid, target, 0)
    x_t = jnp.take_along_axis(logits, tgt_safe[:, None], axis=1)[:, 0]
    loss = lse - x_t
    if label_smoothing > 0.0:
        eps = label_smoothing / V
        smooth = -eps * jnp.sum(logits, axis=1) + label_smoothing * lse
        loss = loss * (1.0 - label_smoothing) + smooth
    z = lse_square_scale * lse * lse
    loss = jnp.where(valid, loss + z, 0.0)
    z = jnp.where(valid, z, 0.0)
    if reduction == 'mean':
        n = jnp.sum(valid.astype(jnp.float32))
        return jnp.sum(loss) / n, jnp.sum(z) / n
    return jnp.sum(loss), jnp.sum(z)


if __name__ == "__main__":
    key = jax.random.PRNGKey(0)
    k_in, k_w, k_b, k_t = jax.random.split(key, 4)

    # Deliberately non-aligned BT / V to exercise the padding + masking paths.
    BT, H, V = 12, 128, 200
    # Build the operands in bf16 so the f32 reference sees identical values.
    _input = jax.random.normal(k_in, (BT, H), dtype=jnp.float32).astype(
        jnp.bfloat16)
    lin_weight = (jax.random.normal(k_w, (V, H), dtype=jnp.float32)
                  * 0.05).astype(jnp.bfloat16)
    bias = jax.random.normal(k_b, (V,), dtype=jnp.float32) * 0.01
    target = jax.random.randint(k_t, (BT,), 0, V, dtype=jnp.int32)
    target = target.at[3].set(-100).at[7].set(-100)  # exercise ignore_index

    # Case 1: softcap + label smoothing + z-loss, mean reduction
    #         (exercises the in-kernel vocab-pad masking path).
    module = LigerFusedLinearCrossEntropyLoss(
        ignore_index=-100, lse_square_scale=1e-4, label_smoothing=0.1,
        reduction='mean', softcap=30.0, return_z_loss=True)
    loss, z_loss = module(lin_weight, _input, target, bias)
    jax.block_until_ready((loss, z_loss))
    ref_loss, ref_z = _reference(
        lin_weight, _input, target, bias, ignore_index=-100,
        lse_square_scale=1e-4, label_smoothing=0.1, reduction='mean',
        softcap=30.0)
    assert jnp.allclose(loss, ref_loss, rtol=2e-3, atol=2e-4), (loss, ref_loss)
    assert jnp.allclose(z_loss, ref_z, rtol=2e-3, atol=2e-4), (z_loss, ref_z)

    # Case 2: plain CE, sum reduction (exercises the mask-free negative-bias
    #         padding fast path).
    module2 = LigerFusedLinearCrossEntropyLoss(
        ignore_index=-100, reduction='sum')
    loss2 = module2(lin_weight, _input, target, bias)
    jax.block_until_ready(loss2)
    ref_loss2, _ = _reference(
        lin_weight, _input, target, bias, ignore_index=-100,
        lse_square_scale=0.0, label_smoothing=0.0, reduction='sum',
        softcap=None)
    assert jnp.allclose(loss2, ref_loss2, rtol=2e-3, atol=2e-4), (loss2,
                                                                  ref_loss2)

    print("KERNEL_OK")
</pallas_src>

<mosaic_0001>
module attributes {stable_mosaic.version = 11 : i64} {
  func.func @_flce_kernel(%arg0: i32, %arg1: i32, %arg2: memref<16x128xbf16, #tpu.memory_space<vmem>>, %arg3: memref<256x128xbf16, #tpu.memory_space<vmem>>, %arg4: memref<1x256xf32, #tpu.memory_space<vmem>>, %arg5: memref<16x1xi32, #tpu.memory_space<vmem>>, %arg6: memref<16x1xf32, #tpu.memory_space<vmem>>, %arg7: memref<16x1xf32, #tpu.memory_space<vmem>>, %arg8: memref<16x1xf32, #tpu.memory_space<vmem>>, %arg9: memref<16x1xf32, #tpu.memory_space<vmem>>, %arg10: memref<16x1xf32, #tpu.memory_space<vmem>>, %arg11: memref<16x1xf32, #tpu.memory_space<vmem>>) attributes {dimension_semantics = [#tpu.dimension_semantics<parallel>, #tpu.dimension_semantics<arbitrary>], iteration_bounds = array<i64: 1, 1>, scalar_prefetch = 0 : i64, scratch_operands = 4 : i64, tpu.core_type = #tpu.core_type<tc>, window_params = [{transform_indices = @transform_0, window_bounds = array<i64: 16, 128>}, {transform_indices = @transform_1, window_bounds = array<i64: 256, 128>}, {transform_indices = @transform_2, window_bounds = array<i64: 1, 256>}, {transform_indices = @transform_3, window_bounds = array<i64: 16, 1>}, {transform_indices = @transform_4, window_bounds = array<i64: 16, 1>}, {transform_indices = @transform_5, window_bounds = array<i64: 16, 1>}]} {
    %c0_i32 = arith.constant 0 : i32
    %0 = arith.cmpi eq, %arg1, %c0_i32 : i32
    %1 = arith.extui %0 : i1 to i32
    %c0_i32_0 = arith.constant 0 : i32
    %2 = arith.cmpi ne, %1, %c0_i32_0 : i32
    scf.if %2 {
      %cst_37 = arith.constant 0xFF800000 : f32
      %64 = vector.broadcast %cst_37 : f32 to vector<16x1xf32>
      %c0_38 = arith.constant 0 : index
      %c0_39 = arith.constant 0 : index
      %65 = vector.load %arg8[%c0_38, %c0_39] : memref<16x1xf32, #tpu.memory_space<vmem>>, vector<16x1xf32>
      tpu.vector_store %arg8[%c0_38, %c0_39], %64 {strides = array<i32>} : memref<16x1xf32, #tpu.memory_space<vmem>>, vector<16x1xf32>,
      %cst_40 = arith.constant 0.000000e+00 : f32
      %66 = vector.broadcast %cst_40 : f32 to vector<16x1xf32>
      %c0_41 = arith.constant 0 : index
      %c0_42 = arith.constant 0 : index
      %67 = vector.load %arg9[%c0_41, %c0_42] : memref<16x1xf32, #tpu.memory_space<vmem>>, vector<16x1xf32>
      tpu.vector_store %arg9[%c0_41, %c0_42], %66 {strides = array<i32>} : memref<16x1xf32, #tpu.memory_space<vmem>>, vector<16x1xf32>,
      %cst_43 = arith.constant 0.000000e+00 : f32
      %68 = vector.broadcast %cst_43 : f32 to vector<16x1xf32>
      %c0_44 = arith.constant 0 : index
      %c0_45 = arith.constant 0 : index
      %69 = vector.load %arg10[%c0_44, %c0_45] : memref<16x1xf32, #tpu.memory_space<vmem>>, vector<16x1xf32>
      tpu.vector_store %arg10[%c0_44, %c0_45], %68 {strides = array<i32>} : memref<16x1xf32, #tpu.memory_space<vmem>>, vector<16x1xf32>,
      %cst_46 = arith.constant 0.000000e+00 : f32
      %70 = vector.broadcast %cst_46 : f32 to vector<16x1xf32>
      %c0_47 = arith.constant 0 : index
      %c0_48 = arith.constant 0 : index
      %71 = vector.load %arg11[%c0_47, %c0_48] : memref<16x1xf32, #tpu.memory_space<vmem>>, vector<16x1xf32>
      tpu.vector_store %arg11[%c0_47, %c0_48], %70 {strides = array<i32>} : memref<16x1xf32, #tpu.memory_space<vmem>>, vector<16x1xf32>,
    } else {
    }
    %c0 = arith.constant 0 : index
    %c0_1 = arith.constant 0 : index
    %3 = vector.load %arg2[%c0, %c0_1] : memref<16x128xbf16, #tpu.memory_space<vmem>>, vector<16x128xbf16>
    %c0_2 = arith.constant 0 : index
    %c0_3 = arith.constant 0 : index
    %4 = vector.load %arg3[%c0_2, %c0_3] : memref<256x128xbf16, #tpu.memory_space<vmem>>, vector<256x128xbf16>
    %cst = arith.constant dense<0.000000e+00> : vector<16x256xf32>
    %5 = tpu.matmul %3, %4, %cst {dimension_numbers = #tpu.dot_dimension_numbers<[1], [1], [0], [0], [0, 0, 1, 0], [], []>} : vector<16x128xbf16>, vector<256x128xbf16>, vector<16x256xf32> -> vector<16x256xf32>
    %c0_4 = arith.constant 0 : index
    %c0_5 = arith.constant 0 : index
    %6 = vector.load %arg4[%c0_4, %c0_5] : memref<1x256xf32, #tpu.memory_space<vmem>>, vector<1x256xf32>
    %7 = vector.broadcast %6 : vector<1x256xf32> to vector<16x256xf32>
    %8 = arith.addf %5, %7 : vector<16x256xf32>
    %cst_6 = arith.constant 0.0333333351 : f32
    %9 = vector.broadcast %cst_6 : f32 to vector<16x256xf32>
    %10 = arith.mulf %8, %9 : vector<16x256xf32>
    %11 = math.tanh %10 : vector<16x256xf32>
    %cst_7 = arith.constant 3.000000e+01 : f32
    %12 = vector.broadcast %cst_7 : f32 to vector<16x256xf32>
    %13 = arith.mulf %12, %11 : vector<16x256xf32>
    %14 = tpu.iota {dimensions = array<i32: 1>} : vector<1x256xi32>
    %c256_i32 = arith.constant 256 : i32
    %15 = arith.muli %arg1, %c256_i32 : i32
    %16 = vector.broadcast %15 : i32 to vector<1x256xi32>
    %17 = arith.addi %14, %16 : vector<1x256xi32>
    %c0_8 = arith.constant 0 : index
    %c0_9 = arith.constant 0 : index
    %18 = vector.load %arg5[%c0_8, %c0_9] : memref<16x1xi32, #tpu.memory_space<vmem>>, vector<16x1xi32>
    %19 = vector.broadcast %17 : vector<1x256xi32> to vector<16x256xi32>
    %20 = vector.broadcast %18 : vector<16x1xi32> to vector<16x256xi32>
    %21 = arith.cmpi eq, %19, %20 : vector<16x256xi32>
    %c0_10 = arith.constant 0 : index
    %c0_11 = arith.constant 0 : index
    %22 = vector.load %arg10[%c0_10, %c0_11] : memref<16x1xf32, #tpu.memory_space<vmem>>, vector<16x1xf32>
    %cst_12 = arith.constant 0.000000e+00 : f32
    %23 = vector.broadcast %cst_12 : f32 to vector<16x256xf32>
    %24 = arith.select %21, %13, %23 : vector<16x256xi1>, vector<16x256xf32>
    %cst_13 = arith.constant dense<0.000000e+00> : vector<16xf32>
    %25 = vector.multi_reduction <add>, %24, %cst_13 [1] : vector<16x256xf32> to vector<16xf32>
    %26 = vector.shape_cast %25 : vector<16xf32> to vector<16x1xf32>
    %27 = arith.addf %22, %26 : vector<16x1xf32>
    %c0_14 = arith.constant 0 : index
    %c0_15 = arith.constant 0 : index
    %28 = vector.load %arg10[%c0_14, %c0_15] : memref<16x1xf32, #tpu.memory_space<vmem>>, vector<16x1xf32>
    tpu.vector_store %arg10[%c0_14, %c0_15], %27 {strides = array<i32>} : memref<16x1xf32, #tpu.memory_space<vmem>>, vector<16x1xf32>,
    %c200_i32 = arith.constant 200 : i32
    %29 = vector.broadcast %c200_i32 : i32 to vector<1x256xi32>
    %30 = arith.cmpi slt, %17, %29 : vector<1x256xi32>
    %c0_16 = arith.constant 0 : index
    %c0_17 = arith.constant 0 : index
    %31 = vector.load %arg11[%c0_16, %c0_17] : memref<16x1xf32, #tpu.memory_space<vmem>>, vector<16x1xf32>
    %cst_18 = arith.constant 0.000000e+00 : f32
    %32 = vector.shape_cast %30 : vector<1x256xi1> to vector<1x256xi1>
    %33 = vector.broadcast %32 : vector<1x256xi1> to vector<16x256xi1>
    %34 = vector.broadcast %cst_18 : f32 to vector<16x256xf32>
    %35 = arith.select %33, %13, %34 : vector<16x256xi1>, vector<16x256xf32>
    %cst_19 = arith.constant dense<0.000000e+00> : vector<16xf32>
    %36 = vector.multi_reduction <add>, %35, %cst_19 [1] : vector<16x256xf32> to vector<16xf32>
    %37 = vector.shape_cast %36 : vector<16xf32> to vector<16x1xf32>
    %38 = arith.addf %31, %37 : vector<16x1xf32>
    %c0_20 = arith.constant 0 : index
    %c0_21 = arith.constant 0 : index
    %39 = vector.load %arg11[%c0_20, %c0_21] : memref<16x1xf32, #tpu.memory_space<vmem>>, vector<16x1xf32>
    tpu.vector_store %arg11[%c0_20, %c0_21], %38 {strides = array<i32>} : memref<16x1xf32, #tpu.memory_space<vmem>>, vector<16x1xf32>,
    %cst_22 = arith.constant 0xFF800000 : f32
    %40 = vector.shape_cast %30 : vector<1x256xi1> to vector<1x256xi1>
    %41 = vector.broadcast %40 : vector<1x256xi1> to vector<16x256xi1>
    %42 = vector.broadcast %cst_22 : f32 to vector<16x256xf32>
    %43 = arith.select %41, %13, %42 : vector<16x256xi1>, vector<16x256xf32>
    %c0_23 = arith.constant 0 : index
    %c0_24 = arith.constant 0 : index
    %44 = vector.load %arg8[%c0_23, %c0_24] : memref<16x1xf32, #tpu.memory_space<vmem>>, vector<16x1xf32>
    %cst_25 = arith.constant dense<0xFF800000> : vector<16xf32>
    %45 = vector.multi_reduction <maximumf>, %43, %cst_25 [1] : vector<16x256xf32> to vector<16xf32>
    %46 = vector.shape_cast %45 : vector<16xf32> to vector<16x1xf32>
    %47 = arith.maximumf %44, %46 : vector<16x1xf32>
    %c0_26 = arith.constant 0 : index
    %c0_27 = arith.constant 0 : index
    %48 = vector.load %arg9[%c0_26, %c0_27] : memref<16x1xf32, #tpu.memory_space<vmem>>, vector<16x1xf32>
    %c0_28 = arith.constant 0 : index
    %c0_29 = arith.constant 0 : index
    %49 = vector.load %arg8[%c0_28, %c0_29] : memref<16x1xf32, #tpu.memory_space<vmem>>, vector<16x1xf32>
    %50 = arith.subf %49, %47 : vector<16x1xf32>
    %51 = math.exp %50 : vector<16x1xf32>
    %52 = arith.mulf %48, %51 : vector<16x1xf32>
    %53 = vector.broadcast %47 : vector<16x1xf32> to vector<16x256xf32>
    %54 = arith.subf %43, %53 : vector<16x256xf32>
    %55 = math.exp %54 : vector<16x256xf32>
    %cst_30 = arith.constant dense<0.000000e+00> : vector<16xf32>
    %56 = vector.multi_reduction <add>, %55, %cst_30 [1] : vector<16x256xf32> to vector<16xf32>
    %57 = vector.shape_cast %56 : vector<16xf32> to vector<16x1xf32>
    %58 = arith.addf %52, %57 : vector<16x1xf32>
    %c0_31 = arith.constant 0 : index
    %c0_32 = arith.constant 0 : index
    %59 = vector.load %arg9[%c0_31, %c0_32] : memref<16x1xf32, #tpu.memory_space<vmem>>, vector<16x1xf32>
    tpu.vector_store %arg9[%c0_31, %c0_32], %58 {strides = array<i32>} : memref<16x1xf32, #tpu.memory_space<vmem>>, vector<16x1xf32>,
    %c0_33 = arith.constant 0 : index
    %c0_34 = arith.constant 0 : index
    %60 = vector.load %arg8[%c0_33, %c0_34] : memref<16x1xf32, #tpu.memory_space<vmem>>, vector<16x1xf32>
    tpu.vector_store %arg8[%c0_33, %c0_34], %47 {strides = array<i32>} : memref<16x1xf32, #tpu.memory_space<vmem>>, vector<16x1xf32>,
    %c0_i32_35 = arith.constant 0 : i32
    %61 = arith.cmpi eq, %arg1, %c0_i32_35 : i32
    %62 = arith.extui %61 : i1 to i32
    %c0_i32_36 = arith.constant 0 : i32
    %63 = arith.cmpi ne, %62, %c0_i32_36 : i32
    scf.if %63 {
      %c0_37 = arith.constant 0 : index
      %c0_38 = arith.constant 0 : index
      %64 = vector.load %arg8[%c0_37, %c0_38] : memref<16x1xf32, #tpu.memory_space<vmem>>, vector<16x1xf32>
      %c0_39 = arith.constant 0 : index
      %c0_40 = arith.constant 0 : index
      %65 = vector.load %arg9[%c0_39, %c0_40] : memref<16x1xf32, #tpu.memory_space<vmem>>, vector<16x1xf32>
      %66 = math.log %65 : vector<16x1xf32>
      %67 = arith.addf %64, %66 : vector<16x1xf32>
      %c0_41 = arith.constant 0 : index
      %c0_42 = arith.constant 0 : index
      %68 = vector.load %arg10[%c0_41, %c0_42] : memref<16x1xf32, #tpu.memory_space<vmem>>, vector<16x1xf32>
      %69 = arith.subf %67, %68 : vector<16x1xf32>
      %c0_43 = arith.constant 0 : index
      %c0_44 = arith.constant 0 : index
      %70 = vector.load %arg11[%c0_43, %c0_44] : memref<16x1xf32, #tpu.memory_space<vmem>>, vector<16x1xf32>
      %cst_45 = arith.constant -5.000000e-04 : f32
      %71 = vector.broadcast %cst_45 : f32 to vector<16x1xf32>
      %72 = arith.mulf %71, %70 : vector<16x1xf32>
      %cst_46 = arith.constant 1.000000e-01 : f32
      %73 = vector.broadcast %cst_46 : f32 to vector<16x1xf32>
      %74 = arith.mulf %73, %67 : vector<16x1xf32>
      %75 = arith.addf %72, %74 : vector<16x1xf32>
      %cst_47 = arith.constant 0.899999976 : f32
      %76 = vector.broadcast %cst_47 : f32 to vector<16x1xf32>
      %77 = arith.mulf %69, %76 : vector<16x1xf32>
      %78 = arith.addf %77, %75 : vector<16x1xf32>
      %cst_48 = arith.constant 9.99999974E-5 : f32
      %79 = vector.broadcast %cst_48 : f32 to vector<16x1xf32>
      %80 = arith.mulf %79, %67 : vector<16x1xf32>
      %81 = arith.mulf %80, %67 : vector<16x1xf32>
      %82 = arith.addf %78, %81 : vector<16x1xf32>
      %c-100_i32 = arith.constant -100 : i32
      %83 = vector.broadcast %c-100_i32 : i32 to vector<16x1xi32>
      %84 = arith.cmpi ne, %18, %83 : vector<16x1xi32>
      %cst_49 = arith.constant 0.000000e+00 : f32
      %85 = vector.broadcast %cst_49 : f32 to vector<16x1xf32>
      %86 = arith.select %84, %82, %85 : vector<16x1xi1>, vector<16x1xf32>
      %c0_50 = arith.constant 0 : index
      %c0_51 = arith.constant 0 : index
      %87 = vector.load %arg6[%c0_50, %c0_51] : memref<16x1xf32, #tpu.memory_space<vmem>>, vector<16x1xf32>
      tpu.vector_store %arg6[%c0_50, %c0_51], %86 {strides = array<i32>} : memref<16x1xf32, #tpu.memory_space<vmem>>, vector<16x1xf32>,
      %cst_52 = arith.constant 0.000000e+00 : f32
      %88 = vector.broadcast %cst_52 : f32 to vector<16x1xf32>
      %89 = arith.select %84, %81, %88 : vector<16x1xi1>, vector<16x1xf32>
      %c0_53 = arith.constant 0 : index
      %c0_54 = arith.constant 0 : index
      %90 = vector.load %arg7[%c0_53, %c0_54] : memref<16x1xf32, #tpu.memory_space<vmem>>, vector<16x1xf32>
      tpu.vector_store %arg7[%c0_53, %c0_54], %89 {strides = array<i32>} : memref<16x1xf32, #tpu.memory_space<vmem>>, vector<16x1xf32>,
    } else {
    }
    return
  }
  func.func @transform_0(%arg0: i32, %arg1: i32) -> (i32, i32) {
    %c0_i32 = arith.constant 0 : i32
    %c0_i32_0 = arith.constant 0 : i32
    return %arg0, %c0_i32 : i32, i32
  }
  func.func @transform_1(%arg0: i32, %arg1: i32) -> (i32, i32) {
    %c0_i32 = arith.constant 0 : i32
    %c0_i32_0 = arith.constant 0 : i32
    return %arg1, %c0_i32 : i32, i32
  }
  func.func @transform_2(%arg0: i32, %arg1: i32) -> (i32, i32) {
    %c0_i32 = arith.constant 0 : i32
    %c0_i32_0 = arith.constant 0 : i32
    return %c0_i32, %arg1 : i32, i32
  }
  func.func @transform_3(%arg0: i32, %arg1: i32) -> (i32, i32) {
    %c0_i32 = arith.constant 0 : i32
    %c0_i32_0 = arith.constant 0 : i32
    return %arg0, %c0_i32 : i32, i32
  }
  func.func @transform_4(%arg0: i32, %arg1: i32) -> (i32, i32) {
    %c0_i32 = arith.constant 0 : i32
    %c0_i32_0 = arith.constant 0 : i32
    return %arg0, %c0_i32 : i32, i32
  }
  func.func @transform_5(%arg0: i32, %arg1: i32) -> (i32, i32) {
    %c0_i32 = arith.constant 0 : i32
    %c0_i32_0 = arith.constant 0 : i32
    return %arg0, %c0_i32 : i32, i32
  }
}

</mosaic_0001>

<llo_original>
// kernel: tpu_custom_call.1
$region0: #{tpu_custom_call.1}
  #allocation0 [shape = 'u32[]', space=smem, size = 0x4, offset = 0x4, fixed_abs, tag = 'smem constant byte address 0x4 - core index']
  #allocation1 [shape = 'u32[144,128]{1,0:T(1,128)}', space=vmem, size = 0x12000, scoped, tag = 'internal scratch']
  #allocation2 [shape = 'f32[16,1]{1,0:T(8,128)}', space=vmem, size = 0x2000, scoped, tag = 'scratch operand']
  #allocation3 [shape = 'f32[16,1]{1,0:T(8,128)}', space=vmem, size = 0x2000, scoped, tag = 'scratch operand']
  #allocation4 [shape = 'f32[16,1]{1,0:T(8,128)}', space=vmem, size = 0x2000, scoped, tag = 'scratch operand']
  #allocation5 [shape = 'f32[16,1]{1,0:T(8,128)}', space=vmem, size = 0x2000, scoped, tag = 'scratch operand']
  %s0 = inlined_call_operand.vmem [shape: bf16[16,128], index: 0, kind: input, shape index: {}]
  %s1 = inlined_call_operand.hbm [shape: bf16[256,128], index: 1, kind: input, shape index: {}]
  %s2 = inlined_call_operand.vmem [shape: f32[1,256], index: 2, kind: input, shape index: {}]
  %s3 = inlined_call_operand.vmem [shape: s32[16,1], index: 3, kind: input, shape index: {}]
  %s4 = inlined_call_operand.vmem [shape: f32[16,1], index: 4, kind: output, shape index: {0}]
  %s5 = inlined_call_operand.vmem [shape: f32[16,1], index: 5, kind: output, shape index: {1}]
  %6 = xla_tuple %s4, %s5
  %s7 = sld [smem:[#allocation0]]
  $region46: #{tpu_custom_call.1} parent=0
    _
  %s9 = ssub.s32 1, %s7
  %s10 = scalar_select 0, %s9, %s7
  $region1: #{tpu_custom_call.1} parent=0
    #allocation6 [shape = 'u8[65536]{0}', space=vmem, size = 0x10000, scoped, tag = 'input window, operand 1, single buffered']
    #allocation7 [shape = 's32[1]{0}', space=sflag, size = 0x4, scoped, tag = 'scoped memory for tpu_custom_call.1']
    %11 = vsyncpa [#allocation7], 0
    // Predicated region
    $region2: #{tpu_custom_call.1} parent=1 // pred_check
      _
    $region3: #{tpu_custom_call.1} parent=1 // pred_check_branch
      %13 = sbr.rel (0) target = $region5
    $region4: #{tpu_custom_call.1} parent=1 // pred_region
      _
    $region5: #{tpu_custom_call.1} parent=1 // pred_fallthru
      _
    // Predicated region
    $region6: #{tpu_custom_call.1} parent=1 // pred_check
      _
    $region7: #{tpu_custom_call.1} parent=1 // pred_check_branch
      %15 = sbr.rel (0) target = $region9
    $region8: #{tpu_custom_call.1} parent=1 // pred_region
      %s17 = ssub.s32 2048, 2048
      %18 = vsyncadd [#allocation7], %s17
      %s19 = sshll.u32 [#allocation6], 4
      %s20 = int_to_ptr.vmem [resolvable:$true] %s19
      %25 = dma.hbm_to_vmem [thread:$0]  %s1, 2048, %s20, [#allocation7], 64, 64, 4
    $region9: #{tpu_custom_call.1} parent=1 // pred_fallthru
      _
    // Predicated region
    $region10: #{tpu_custom_call.1} parent=1 // pred_check
      _
    $region11: #{tpu_custom_call.1} parent=1 // pred_check_branch
      %27 = sbr.rel (0) target = $region13
    $region12: #{tpu_custom_call.1} parent=1 // pred_region
      _
    $region13: #{tpu_custom_call.1} parent=1 // pred_fallthru
      _
    // Predicated region
    $region14: #{tpu_custom_call.1} parent=1 // pred_check
      _
    $region15: #{tpu_custom_call.1} parent=1 // pred_check_branch
      %29 = sbr.rel (0) target = $region17
    $region16: #{tpu_custom_call.1} parent=1 // pred_region
      _
    $region17: #{tpu_custom_call.1} parent=1 // pred_fallthru
      _
    // Predicated region
    $region18: #{tpu_custom_call.1} parent=1 // pred_check
      _
    $region19: #{tpu_custom_call.1} parent=1 // pred_check_branch
      %31 = sbr.rel (0) target = $region21
    $region20: #{tpu_custom_call.1} parent=1 // pred_region
      %32 = dma.done [#allocation7], 2048
    $region21: #{tpu_custom_call.1} parent=1 // pred_fallthru
      _
    %p34 = scmp.eq.s32.totalorder 0, 0
    // Predicated region
    $region22: #{tpu_custom_call.1} parent=1 // pred_check
      %p35 = pneg %p34
    $region23: #{tpu_custom_call.1} parent=1 // pred_check_branch
      %37 = sbr.rel (%p35) target = $region25
    $region24: #{tpu_custom_call.1} parent=1 // pred_region
      %vm38 = vcmask 7168
      %39 = vst.msk [vmem:[#allocation2] sm:$0xff] %vm38, -inf
      %40 = vst.msk [vmem:[#allocation2 + $0x8] sm:$0xff] %vm38, -inf
      %41 = vst.msk [vmem:[#allocation3] sm:$0xff] %vm38, 0.0
      %42 = vst.msk [vmem:[#allocation3 + $0x8] sm:$0xff] %vm38, 0.0
      %43 = vst.msk [vmem:[#allocation4] sm:$0xff] %vm38, 0.0
      %44 = vst.msk [vmem:[#allocation4 + $0x8] sm:$0xff] %vm38, 0.0
      %45 = vst.msk [vmem:[#allocation5] sm:$0xff] %vm38, 0.0
      %46 = vst.msk [vmem:[#allocation5 + $0x8] sm:$0xff] %vm38, 0.0
    $region25: #{tpu_custom_call.1} parent=1 // pred_fallthru
      _
    %v47 = vld [vmem:[%s0] sm:$0xf]
    %v48 = vld [vmem:[%s0 + $0x4] sm:$0xf]
    %v49 = vld [vmem:[#allocation6] sm:$0xf]
    %v50 = vld [vmem:[#allocation6 + $0x4] sm:$0xf]
    %v51 = vld [vmem:[#allocation6 + $0x8] sm:$0xf]
    %v52 = vld [vmem:[#allocation6 + $0xc] sm:$0xf]
    %v53 = vld [vmem:[#allocation6 + $0x10] sm:$0xf]
    %v54 = vld [vmem:[#allocation6 + $0x14] sm:$0xf]
    %v55 = vld [vmem:[#allocation6 + $0x18] sm:$0xf]
    %v56 = vld [vmem:[#allocation6 + $0x1c] sm:$0xf]
    %v57 = vld [vmem:[#allocation6 + $0x20] sm:$0xf]
    %v58 = vld [vmem:[#allocation6 + $0x24] sm:$0xf]
    %v59 = vld [vmem:[#allocation6 + $0x28] sm:$0xf]
    %v60 = vld [vmem:[#allocation6 + $0x2c] sm:$0xf]
    %v61 = vld [vmem:[#allocation6 + $0x30] sm:$0xf]
    %v62 = vld [vmem:[#allocation6 + $0x34] sm:$0xf]
    %v63 = vld [vmem:[#allocation6 + $0x38] sm:$0xf]
    %v64 = vld [vmem:[#allocation6 + $0x3c] sm:$0xf]
    %v65 = vld [vmem:[#allocation6 + $0x40] sm:$0xf]
    %v66 = vld [vmem:[#allocation6 + $0x44] sm:$0xf]
    %v67 = vld [vmem:[#allocation6 + $0x48] sm:$0xf]
    %v68 = vld [vmem:[#allocation6 + $0x4c] sm:$0xf]
    %v69 = vld [vmem:[#allocation6 + $0x50] sm:$0xf]
    %v70 = vld [vmem:[#allocation6 + $0x54] sm:$0xf]
    %v71 = vld [vmem:[#allocation6 + $0x58] sm:$0xf]
    %v72 = vld [vmem:[#allocation6 + $0x5c] sm:$0xf]
    %v73 = vld [vmem:[#allocation6 + $0x60] sm:$0xf]
    %v74 = vld [vmem:[#allocation6 + $0x64] sm:$0xf]
    %v75 = vld [vmem:[#allocation6 + $0x68] sm:$0xf]
    %v76 = vld [vmem:[#allocation6 + $0x6c] sm:$0xf]
    %v77 = vld [vmem:[#allocation6 + $0x70] sm:$0xf]
    %v78 = vld [vmem:[#allocation6 + $0x74] sm:$0xf]
    %v79 = vld [vmem:[#allocation6 + $0x78] sm:$0xf]
    %v80 = vld [vmem:[#allocation6 + $0x7c] sm:$0xf]
    %v81 = vld [vmem:[%s2] sm:$0x3]
    %v83 = vlaneseq
    %v84 = vshrl.u32 %v83, 7
    %v85 = vsub.s32 0, %v84
    %v86 = vrot.slane %v81, %v85
    %v87 = vlaneseq
    %v88 = vshrl.u32 %v87, 7
    %v89 = vsub.s32 1, %v88
    %v90 = vrot.slane %v81, %v89
    %v95 = vunpack.c.l.b16 %v47
    %v96 = vunpack.c.l.b16 %v48
    %v97 = vpack.c.b16 %v96, %v95
    %v131 = vunpack.c.l.b16 %v49
    %v132 = vunpack.c.l.b16 %v50
    %v133 = vunpack.c.l.b16 %v51
    %v134 = vunpack.c.l.b16 %v52
    %v135 = vunpack.c.l.b16 %v53
    %v136 = vunpack.c.l.b16 %v54
    %v137 = vunpack.c.l.b16 %v55
    %v138 = vunpack.c.l.b16 %v56
    %v139 = vunpack.c.l.b16 %v57
    %v140 = vunpack.c.l.b16 %v58
    %v141 = vunpack.c.l.b16 %v59
    %v142 = vunpack.c.l.b16 %v60
    %v143 = vunpack.c.l.b16 %v61
    %v144 = vunpack.c.l.b16 %v62
    %v145 = vunpack.c.l.b16 %v63
    %v146 = vunpack.c.l.b16 %v64
    %v147 = vunpack.c.l.b16 %v65
    %v148 = vunpack.c.l.b16 %v66
    %v149 = vunpack.c.l.b16 %v67
    %v150 = vunpack.c.l.b16 %v68
    %v151 = vunpack.c.l.b16 %v69
    %v152 = vunpack.c.l.b16 %v70
    %v153 = vunpack.c.l.b16 %v71
    %v154 = vunpack.c.l.b16 %v72
    %v155 = vunpack.c.l.b16 %v73
    %v156 = vunpack.c.l.b16 %v74
    %v157 = vunpack.c.l.b16 %v75
    %v158 = vunpack.c.l.b16 %v76
    %v159 = vunpack.c.l.b16 %v77
    %v160 = vunpack.c.l.b16 %v78
    %v161 = vunpack.c.l.b16 %v79
    %v162 = vunpack.c.l.b16 %v80
    %v163 = vpack.c.b16 %v132, %v131
    %v164 = vpack.c.b16 %v134, %v133
    %v165 = vpack.c.b16 %v136, %v135
    %v166 = vpack.c.b16 %v138, %v137
    %v167 = vpack.c.b16 %v140, %v139
    %v168 = vpack.c.b16 %v142, %v141
    %v169 = vpack.c.b16 %v144, %v143
    %v170 = vpack.c.b16 %v146, %v145
    %v171 = vpack.c.b16 %v148, %v147
    %v172 = vpack.c.b16 %v150, %v149
    %v173 = vpack.c.b16 %v152, %v151
    %v174 = vpack.c.b16 %v154, %v153
    %v175 = vpack.c.b16 %v156, %v155
    %v176 = vpack.c.b16 %v158, %v157
    %v177 = vpack.c.b16 %v160, %v159
    %v178 = vpack.c.b16 %v162, %v161
    %195 = vmatprep.subr.bf16.mxu0 0
    %196 = vmatpush1.bf16.xpose.msra.mxu0 %v163
    %197 = vmatprep.subr.bf16.mxu0 0
    %198 = vmatpush1.bf16.xpose.msra.mxu0 %v164
    %199 = vmatprep.subr.bf16.mxu0 0
    %200 = vmatpush1.bf16.xpose.msra.mxu0 %v165
    %201 = vmatprep.subr.bf16.mxu0 0
    %202 = vmatpush1.bf16.xpose.msra.mxu0 %v166
    %203 = vmatprep.subr.bf16.mxu0 0
    %204 = vmatpush1.bf16.xpose.msra.mxu0 %v167
    %205 = vmatprep.subr.bf16.mxu0 0
    %206 = vmatpush1.bf16.xpose.msra.mxu0 %v168
    %207 = vmatprep.subr.bf16.mxu0 0
    %208 = vmatpush1.bf16.xpose.msra.mxu0 %v169
    %209 = vmatprep.subr.bf16.mxu0 0
    %210 = vmatpush1.bf16.xpose.msra.mxu0 %v170
    %211 = vmatprep.subr.bf16.mxu0 0
    %212 = vmatpush1.bf16.xpose.msra.mxu0 %v171
    %213 = vmatprep.subr.bf16.mxu0 0
    %214 = vmatpush1.bf16.xpose.msra.mxu0 %v172
    %215 = vmatprep.subr.bf16.mxu0 0
    %216 = vmatpush1.bf16.xpose.msra.mxu0 %v173
    %217 = vmatprep.subr.bf16.mxu0 0
    %218 = vmatpush1.bf16.xpose.msra.mxu0 %v174
    %219 = vmatprep.subr.bf16.mxu0 0
    %220 = vmatpush1.bf16.xpose.msra.mxu0 %v175
    %221 = vmatprep.subr.bf16.mxu0 0
    %222 = vmatpush1.bf16.xpose.msra.mxu0 %v176
    %223 = vmatprep.subr.bf16.mxu0 0
    %224 = vmatpush1.bf16.xpose.msra.mxu0 %v177
    %225 = vmatprep.subr.bf16.mxu0 0
    %226 = vmatpush1.bf16.xpose.msra.mxu0 %v178
    %227 = vmatprep.mubr.bf16.mxu0 0
    %228 = vmatmul.mubr.bf16.gmra.mrb[0].mxu0 %v97
    %v229 = vpop.f32.mrb[0].mxu0
    %v230 = vadd.f32 %v86, %v229
    %v231 = vpop.f32.mrb[0].mxu0
    %v232 = vadd.f32 %v90, %v231
    %v233 = vpop.f32.mrb[0].mxu0
    %v234 = vadd.f32 %v86, %v233
    %v235 = vpop.f32.mrb[0].mxu0
    %v236 = vadd.f32 %v90, %v235
    %237 = vdwg.mxu0
    %v238 = vmul.f32 %v230, 0.033333335
    %v239 = vmul.f32 %v232, 0.033333335
    %v240 = vmul.f32 %v234, 0.033333335
    %v241 = vmul.f32 %v236, 0.033333335
    %v242 = vtanh.pop %v238
    %v243 = vtanh.pop %v239
    %v244 = vtanh.pop %v240
    %v245 = vtanh.pop %v241
    %v246 = vmul.f32 %v242, 30.0
    %v247 = vmul.f32 %v243, 30.0
    %v248 = vmul.f32 %v244, 30.0
    %v249 = vmul.f32 %v245, 30.0
    %v250 = vlaneseq
    %v251 = vand.u32 %v250, 127
    %v252 = vadd.s32 %v251, 128
    %s253 = smul.u32 0, 256
    %v254 = vstv %s253
    %v255 = vadd.s32 %v251, %v254
    %v256 = vadd.s32 %v252, %v254
    %v257 = vld [vmem:[%s3] sm:$0xff]
    %v258 = vld [vmem:[%s3 + $0x8] sm:$0xff]
    %259 = vset.pattern.permute.xlu0 0
    %260 = vperm.xlu0 %259, %v257
    %v261 = vpop.permute.xlu0 %260
    %262 = vset.pattern.permute.xlu0 0
    %263 = vperm.xlu0 %262, %v258
    %v264 = vpop.permute.xlu0 %263
    %vm265 = vcmp.eq.s32.totalorder %v255, %v261
    %vm266 = vcmp.eq.s32.totalorder %v256, %v261
    %vm267 = vcmp.eq.s32.totalorder %v255, %v264
    %vm268 = vcmp.eq.s32.totalorder %v256, %v264
    %v269 = vld [vmem:[#allocation4] sm:$0xff]
    %v270 = vld [vmem:[#allocation4 + $0x8] sm:$0xff]
    %v271 = vsel %vm265, %v246, 0.0
    %v272 = vsel %vm266, %v247, 0.0
    %v273 = vsel %vm267, %v248, 0.0
    %v274 = vsel %vm268, %v249, 0.0
    %v275 = vadd.f32 %v271, %v272
    %276 = vadd.xlane.f32.xlu0 %v275
    %v277 = vpop.xlane.xlu0 %276
    %v278 = vadd.f32 %v273, %v274
    %279 = vadd.xlane.f32.xlu0 %v278
    %v280 = vpop.xlane.xlu0 %279
    %v281 = vadd.f32 %v269, %v277
    %v282 = vadd.f32 %v270, %v280
    %vm283 = vcmask 7168
    %284 = vst.msk [vmem:[#allocation4] sm:$0xff] %vm283, %v281
    %285 = vst.msk [vmem:[#allocation4 + $0x8] sm:$0xff] %vm283, %v282
    %vm286 = vcmp.lt.s32.totalorder %v255, 200
    %vm287 = vcmp.lt.s32.totalorder %v256, 200
    %v288 = vld [vmem:[#allocation5] sm:$0xff]
    %v289 = vld [vmem:[#allocation5 + $0x8] sm:$0xff]
    %v290 = vsel %vm286, 1, 0
    %v291 = vsel %vm287, 1, 0
    %vm292 = vcmp.eq.s32.totalorder %v290, 1
    %vm293 = vcmp.eq.s32.totalorder %v291, 1
    %v294 = vsel %vm292, %v246, 0.0
    %v295 = vsel %vm293, %v247, 0.0
    %v296 = vsel %vm292, %v248, 0.0
    %v297 = vsel %vm293, %v249, 0.0
    %v298 = vadd.f32 %v294, %v295
    %299 = vadd.xlane.f32.xlu0 %v298
    %v300 = vpop.xlane.xlu0 %299
    %v301 = vadd.f32 %v296, %v297
    %302 = vadd.xlane.f32.xlu0 %v301
    %v303 = vpop.xlane.xlu0 %302
    %v304 = vadd.f32 %v288, %v300
    %v305 = vadd.f32 %v289, %v303
    %306 = vst.msk [vmem:[#allocation5] sm:$0xff] %vm283, %v304
    %307 = vst.msk [vmem:[#allocation5 + $0x8] sm:$0xff] %vm283, %v305
    %v308 = vsel %vm292, %v246, -inf
    %v309 = vsel %vm293, %v247, -inf
    %v310 = vsel %vm292, %v248, -inf
    %v311 = vsel %vm293, %v249, -inf
    %v312 = vld [vmem:[#allocation2] sm:$0xff]
    %v313 = vld [vmem:[#allocation2 + $0x8] sm:$0xff]
    %v314 = vmax.f32 %v308, %v309
    %315 = vmax.xlane.f32.xlu0 %v314
    %v316 = vpop.xlane.xlu0 %315
    %v317 = vmax.f32 %v310, %v311
    %318 = vmax.xlane.f32.xlu0 %v317
    %v319 = vpop.xlane.xlu0 %318
    %v320 = vmax.f32 %v312, %v316
    %v321 = vmax.f32 %v313, %v319
    %v322 = vld [vmem:[#allocation3] sm:$0xff]
    %v323 = vld [vmem:[#allocation3 + $0x8] sm:$0xff]
    %v324 = vsub.f32 %v312, %v320
    %v325 = vsub.f32 %v313, %v321
    %v326 = vmul.f32 %v324, 1.442695
    %v327 = vpow.pop %v326
    %v328 = vmul.f32 %v325, 1.442695
    %v329 = vpow.pop %v328
    %v330 = vmul.f32 %v322, %v327
    %v331 = vmul.f32 %v323, %v329
    %333 = vset.pattern.permute.xlu0 0
    %334 = vperm.xlu0 %333, %v320
    %v335 = vpop.permute.xlu0 %334
    %338 = vset.pattern.permute.xlu0 0
    %339 = vperm.xlu0 %338, %v321
    %v340 = vpop.permute.xlu0 %339
    %v342 = vsub.f32 %v308, %v335
    %v343 = vsub.f32 %v309, %v335
    %v344 = vsub.f32 %v310, %v340
    %v345 = vsub.f32 %v311, %v340
    %v346 = vmul.f32 %v342, 1.442695
    %v347 = vpow.pop %v346
    %v348 = vmul.f32 %v343, 1.442695
    %v349 = vpow.pop %v348
    %v350 = vmul.f32 %v344, 1.442695
    %v351 = vpow.pop %v350
    %v352 = vmul.f32 %v345, 1.442695
    %v353 = vpow.pop %v352
    %v354 = vadd.f32 %v347, %v349
    %355 = vadd.xlane.f32.xlu0 %v354
    %v356 = vpop.xlane.xlu0 %355
    %v357 = vadd.f32 %v351, %v353
    %358 = vadd.xlane.f32.xlu0 %v357
    %v359 = vpop.xlane.xlu0 %358
    %v360 = vadd.f32 %v330, %v356
    %v361 = vadd.f32 %v331, %v359
    %362 = vst.msk [vmem:[#allocation3] sm:$0xff] %vm283, %v360
    %363 = vst.msk [vmem:[#allocation3 + $0x8] sm:$0xff] %vm283, %v361
    %364 = vst.msk [vmem:[#allocation2] sm:$0xff] %vm283, %v320
    %365 = vst.msk [vmem:[#allocation2 + $0x8] sm:$0xff] %vm283, %v321
    // Predicated region
    $region26: #{tpu_custom_call.1} parent=1 // pred_check
      %p366 = pneg %p34
    $region27: #{tpu_custom_call.1} parent=1 // pred_check_branch
      %368 = sbr.rel (%p366) target = $region29
    $region28: #{tpu_custom_call.1} parent=1 // pred_region
      %v369 = vld [vmem:[#allocation2] sm:$0xff]
      %v370 = vld [vmem:[#allocation2 + $0x8] sm:$0xff]
      %v371 = vld [vmem:[#allocation3] sm:$0xff]
      %v372 = vld [vmem:[#allocation3 + $0x8] sm:$0xff]
      %v373 = vlog2.pop %v371
      %v374 = vmul.f32 %v373, 0.6931472
      %v375 = vlog2.pop %v372
      %v376 = vmul.f32 %v375, 0.6931472
      %v377 = vadd.f32 %v369, %v374
      %v378 = vadd.f32 %v370, %v376
      %v379 = vld [vmem:[#allocation4] sm:$0xff]
      %v380 = vld [vmem:[#allocation4 + $0x8] sm:$0xff]
      %v381 = vsub.f32 %v377, %v379
      %v382 = vsub.f32 %v378, %v380
      %v383 = vld [vmem:[#allocation5] sm:$0xff]
      %v384 = vld [vmem:[#allocation5 + $0x8] sm:$0xff]
      %v385 = vmul.f32 %v383, -0.0005
      %v386 = vmul.f32 %v384, -0.0005
      %v387 = vmul.f32 %v377, 0.1
      %v388 = vmul.f32 %v378, 0.1
      %v389 = vadd.f32 %v385, %v387
      %v390 = vadd.f32 %v386, %v388
      %v391 = vmul.f32 %v381, 0.9
      %v392 = vmul.f32 %v382, 0.9
      %v393 = vadd.f32 %v391, %v389
      %v394 = vadd.f32 %v392, %v390
      %v395 = vmul.f32 %v377, 0.0001
      %v396 = vmul.f32 %v378, 0.0001
      %v397 = vmul.f32 %v395, %v377
      %v398 = vmul.f32 %v396, %v378
      %v399 = vadd.f32 %v393, %v397
      %v400 = vadd.f32 %v394, %v398
      %vm401 = vcmp.ne.s32.totalorder %v257, 4294967196
      %vm402 = vcmp.ne.s32.totalorder %v258, 4294967196
      %v403 = vsel %vm401, %v399, 0.0
      %v404 = vsel %vm402, %v400, 0.0
      %405 = vst.msk [vmem:[%s4] sm:$0xff] %vm283, %v403
      %406 = vst.msk [vmem:[%s4 + $0x8] sm:$0xff] %vm283, %v404
      %v407 = vsel %vm401, %v397, 0.0
      %v408 = vsel %vm402, %v398, 0.0
      %409 = vst.msk [vmem:[%s5] sm:$0xff] %vm283, %v407
      %410 = vst.msk [vmem:[%s5 + $0x8] sm:$0xff] %vm283, %v408
    $region29: #{tpu_custom_call.1} parent=1 // pred_fallthru
      _
    // Predicated region
    $region30: #{tpu_custom_call.1} parent=1 // pred_check
      _
    $region31: #{tpu_custom_call.1} parent=1 // pred_check_branch
      %412 = sbr.rel (0) target = $region33
    $region32: #{tpu_custom_call.1} parent=1 // pred_region
      _
    $region33: #{tpu_custom_call.1} parent=1 // pred_fallthru
      _
    // Predicated region
    $region34: #{tpu_custom_call.1} parent=1 // pred_check
      _
    $region35: #{tpu_custom_call.1} parent=1 // pred_check_branch
      %414 = sbr.rel (0) target = $region37
    $region36: #{tpu_custom_call.1} parent=1 // pred_region
      _
    $region37: #{tpu_custom_call.1} parent=1 // pred_fallthru
      _
    // Predicated region
    $region38: #{tpu_custom_call.1} parent=1 // pred_check
      _
    $region39: #{tpu_custom_call.1} parent=1 // pred_check_branch
      %416 = sbr.rel (0) target = $region41
    $region40: #{tpu_custom_call.1} parent=1 // pred_region
      _
    $region41: #{tpu_custom_call.1} parent=1 // pred_fallthru
      _
    // Predicated region
    $region42: #{tpu_custom_call.1} parent=1 // pred_check
      _
    $region43: #{tpu_custom_call.1} parent=1 // pred_check_branch
      %418 = sbr.rel (0) target = $region45
    $region44: #{tpu_custom_call.1} parent=1 // pred_region
      _
    $region45: #{tpu_custom_call.1} parent=1 // pred_fallthru
      _
    %419 = vsyncpa [#allocation7], 1

</llo_original>
